<compile_context>
chip_gen: v5e
topology: v5e:2x2
jax: 0.10.0
libtpu: 0.0.40
codegen_flags: <defaults>
</compile_context>

<pallas_src>
import math
import functools

import jax
import jax.numpy as jnp
from jax import lax
from jax.experimental import pallas as pl
from jax.experimental.pallas import tpu as pltpu


# ----------------------------------------------------------------------------
# In-kernel helpers
# ----------------------------------------------------------------------------

def _layernorm(z, g, b, eps):
    # Matches the hand-rolled torch LayerNorm in the spec:
    #   std with Bessel correction (n-1), normalize by (std + eps).
    d = z.shape[-1]
    mean = jnp.mean(z, axis=-1, keepdims=True)
    diff = z - mean
    var = jnp.sum(diff * diff, axis=-1, keepdims=True) * (1.0 / float(d - 1))
    inv = pl.reciprocal(jnp.sqrt(var) + eps, approx=True)      # EUP slot
    return g * (diff * inv) + b


# ----------------------------------------------------------------------------
# Fused encoder-layer kernel (one batch element per program)
# ----------------------------------------------------------------------------

def _encoder_layer_kernel(x_ref, wqkv_ref, bqkv_ref, wo_ref, bo_ref,
                          ln1g_ref, ln1b_ref, w1_ref, b1_ref, w2_ref, b2_ref,
                          ln2g_ref, ln2b_ref, o_ref, attn_scr, *, n_heads, eps):
    # x: [1, T, D] f32; wqkv: [D, 3D] bf16; wo: [D, D] bf16;
    # w1: [D, F] bf16; w2: [F, D] bf16; biases / LN params: f32.
    x = x_ref[0]                                            # [T, D] f32
    T, D = x.shape
    dk = D // n_heads

    # ---- fused Q|K|V projection (attention scale folded into the Q slice) ----
    x_bf = x.astype(jnp.bfloat16)
    qkv = jnp.dot(x_bf, wqkv_ref[...],
                  preferred_element_type=jnp.float32) + bqkv_ref[...]   # [T, 3D] f32
    qkv_bf = qkv.astype(jnp.bfloat16)                       # cast once, slice per head

    # ---- per-head attention; heads written straight into VMEM scratch ----
    for h in range(n_heads):                                # static unrolled
        qh = qkv_bf[:, h * dk:(h + 1) * dk]
        kh = qkv_bf[:, D + h * dk:D + (h + 1) * dk]
        vh = qkv_bf[:, 2 * D + h * dk:2 * D + (h + 1) * dk]
        s = lax.dot_general(qh, kh, (((1,), (1,)), ((), ())),
                            preferred_element_type=jnp.float32)         # [T, T]
        s = s - jnp.max(s, axis=-1, keepdims=True)          # stable softmax (f32)
        p = jnp.exp(s)
        p = p * pl.reciprocal(jnp.sum(p, axis=-1, keepdims=True), approx=True)
        attn_scr[:, h * dk:(h + 1) * dk] = jnp.dot(
            p.astype(jnp.bfloat16), vh, preferred_element_type=jnp.float32)

    # ---- out-projection + residual + LayerNorm 1 ----
    attn_bf = attn_scr[...].astype(jnp.bfloat16)
    attn_out = jnp.dot(attn_bf, wo_ref[...],
                       preferred_element_type=jnp.float32) + bo_ref[...]
    h1 = _layernorm(x + attn_out, ln1g_ref[...], ln1b_ref[...], eps)    # [T, D] f32

    # ---- feed-forward + residual + LayerNorm 2 (h1 never leaves VMEM) ----
    h1_bf = h1.astype(jnp.bfloat16)
    hid = jnp.maximum(jnp.dot(h1_bf, w1_ref[...],
                              preferred_element_type=jnp.float32) + b1_ref[...], 0.0)
    y = jnp.dot(hid.astype(jnp.bfloat16), w2_ref[...],
                preferred_element_type=jnp.float32) + b2_ref[...]
    o_ref[0] = _layernorm(h1 + y, ln2g_ref[...], ln2b_ref[...], eps)


# ----------------------------------------------------------------------------
# Wrapper (pallas_call plumbing)
# ----------------------------------------------------------------------------

def _vmem_limit_bytes(T, D, F):
    weight_bytes = 2 * (D * 3 * D + D * D + D * F + F * D)          # bf16 weights
    small_bytes = 4 * (3 * D + D + F + D + 4 * D)                   # biases / LN
    act_bytes = 4 * (6 * T * D + 2 * T * 3 * D + T * T + T * F)     # f32 activations
    need = 2 * (weight_bytes + small_bytes + act_bytes) + (4 << 20)  # dbl-buf + margin
    return int(min(max(need, 16 << 20), 64 << 20))                  # cap at v7x VMEM


def encoder_layer_forward(params, x, *, n_heads, eps=1e-6):
    B, T, D = x.shape
    d_ff = params["w1"].shape[1]

    const = lambda b: (0, 0)
    out = pl.pallas_call(
        functools.partial(_encoder_layer_kernel, n_heads=n_heads, eps=eps),
        out_shape=jax.ShapeDtypeStruct((B, T, D), jnp.float32),
        grid=(B,),
        in_specs=[
            pl.BlockSpec((1, T, D), lambda b: (b, 0, 0)),       # x
            pl.BlockSpec((D, 3 * D), const),                    # wqkv (bf16)
            pl.BlockSpec((1, 3 * D), const),                    # bqkv
            pl.BlockSpec((D, D), const),                        # wo (bf16)
            pl.BlockSpec((1, D), const),                        # bo
            pl.BlockSpec((1, D), const),                        # ln1 gamma
            pl.BlockSpec((1, D), const),                        # ln1 beta
            pl.BlockSpec((D, d_ff), const),                     # w1 (bf16)
            pl.BlockSpec((1, d_ff), const),                     # b1
            pl.BlockSpec((d_ff, D), const),                     # w2 (bf16)
            pl.BlockSpec((1, D), const),                        # b2
            pl.BlockSpec((1, D), const),                        # ln2 gamma
            pl.BlockSpec((1, D), const),                        # ln2 beta
        ],
        out_specs=pl.BlockSpec((1, T, D), lambda b: (b, 0, 0)),
        scratch_shapes=[pltpu.VMEM((T, D), jnp.float32)],       # per-head attn accum
        compiler_params=pltpu.CompilerParams(
            dimension_semantics=("parallel",),
            vmem_limit_bytes=_vmem_limit_bytes(T, D, d_ff)),
    )(x, params["wqkv"], params["bqkv"], params["wo"], params["bo"],
      params["ln1_g"], params["ln1_b"], params["w1"], params["b1"],
      params["w2"], params["b2"], params["ln2_g"], params["ln2_b"])
    return out


# ----------------------------------------------------------------------------
# Pure-JAX reference (f32 math, same fused/folded weights) for validation
# ----------------------------------------------------------------------------

def reference_forward(params, x, *, n_heads, eps=1e-6):
    B, T, D = x.shape
    dk = D // n_heads

    def ln(z, g, b):
        mean = z.mean(-1, keepdims=True)
        diff = z - mean
        var = (diff * diff).sum(-1, keepdims=True) / (D - 1)
        return g * diff / (jnp.sqrt(var) + eps) + b

    qkv = x @ params["wqkv"].astype(jnp.float32) + params["bqkv"][0]
    q, k, v = qkv[..., :D], qkv[..., D:2 * D], qkv[..., 2 * D:]
    heads = lambda t: t.reshape(B, T, n_heads, dk).transpose(0, 2, 1, 3)
    qh, kh, vh = heads(q), heads(k), heads(v)
    s = jnp.einsum("bhqd,bhkd->bhqk", qh, kh)        # scale pre-folded into wqkv
    p = jax.nn.softmax(s, axis=-1)
    o = jnp.einsum("bhqk,bhkd->bhqd", p, vh).transpose(0, 2, 1, 3).reshape(B, T, D)
    attn_out = o @ params["wo"].astype(jnp.float32) + params["bo"][0]
    h1 = ln(x + attn_out, params["ln1_g"][0], params["ln1_b"][0])
    hid = jax.nn.relu(h1 @ params["w1"].astype(jnp.float32) + params["b1"][0])
    y = hid @ params["w2"].astype(jnp.float32) + params["b2"][0]
    return ln(h1 + y, params["ln2_g"][0], params["ln2_b"][0])


# ----------------------------------------------------------------------------
# Deterministic parameter construction
# ----------------------------------------------------------------------------

def init_params(key, d_model, n_heads, d_ff):
    dk = d_model // n_heads
    scale = 1.0 / math.sqrt(dk)

    def dense(k, fan_in, fan_out):
        w = jax.random.normal(k, (fan_in, fan_out), jnp.float32) * 0.05
        b = jnp.zeros((fan_out,), jnp.float32)
        return w, b

    ks = jax.random.split(key, 6)
    wq, bq = dense(ks[0], d_model, d_model)
    wk, bk = dense(ks[1], d_model, d_model)
    wv, bv = dense(ks[2], d_model, d_model)
    wo, bo = dense(ks[3], d_model, d_model)
    w1, b1 = dense(ks[4], d_model, d_ff)
    w2, b2 = dense(ks[5], d_ff, d_model)

    # Fuse Q|K|V into one [D, 3D] weight; fold 1/sqrt(d_k) into the Q slice.
    wqkv = jnp.concatenate([wq * scale, wk, wv], axis=1)
    bqkv = jnp.concatenate([bq * scale, bk, bv])[None, :]

    return {
        # large weight matrices in bf16 (halves DMA + resident VMEM)
        "wqkv": wqkv.astype(jnp.bfloat16),
        "wo": wo.astype(jnp.bfloat16),
        "w1": w1.astype(jnp.bfloat16),
        "w2": w2.astype(jnp.bfloat16),
        # biases / LN params stay f32 (tiny; adds done in f32)
        "bqkv": bqkv, "bo": bo[None, :],
        "b1": b1[None, :], "b2": b2[None, :],
        "ln1_g": jnp.ones((1, d_model), jnp.float32),
        "ln1_b": jnp.zeros((1, d_model), jnp.float32),
        "ln2_g": jnp.ones((1, d_model), jnp.float32),
        "ln2_b": jnp.zeros((1, d_model), jnp.float32),
    }


# ----------------------------------------------------------------------------
# Main
# ----------------------------------------------------------------------------

if __name__ == "__main__":
    d_model, n_heads, d_ff = 32, 4, 64
    B, T = 2, 8

    key = jax.random.PRNGKey(0)
    k_param, k_x = jax.random.split(key)

    params = init_params(k_param, d_model, n_heads, d_ff)
    x = jax.random.normal(k_x, (B, T, d_model), jnp.float32)

    fwd = jax.jit(functools.partial(encoder_layer_forward, n_heads=n_heads))
    out = jax.block_until_ready(fwd(params, x))

    ref = reference_forward(params, x, n_heads=n_heads)

    assert out.shape == (B, T, d_model)
    assert bool(jnp.all(jnp.isfinite(out)))
    # bf16 activation matmuls + approx reciprocals => generous tolerance.
    assert bool(jnp.allclose(out, ref, atol=5e-2, rtol=5e-2))
    print("KERNEL_OK")
</pallas_src>

<mosaic_0001>
module attributes {stable_mosaic.version = 11 : i64} {
  func.func @_encoder_layer_kernel(%arg0: i32, %arg1: memref<1x8x32xf32, #tpu.memory_space<vmem>>, %arg2: memref<32x96xbf16, #tpu.memory_space<vmem>>, %arg3: memref<1x96xf32, #tpu.memory_space<vmem>>, %arg4: memref<32x32xbf16, #tpu.memory_space<vmem>>, %arg5: memref<1x32xf32, #tpu.memory_space<vmem>>, %arg6: memref<1x32xf32, #tpu.memory_space<vmem>>, %arg7: memref<1x32xf32, #tpu.memory_space<vmem>>, %arg8: memref<32x64xbf16, #tpu.memory_space<vmem>>, %arg9: memref<1x64xf32, #tpu.memory_space<vmem>>, %arg10: memref<64x32xbf16, #tpu.memory_space<vmem>>, %arg11: memref<1x32xf32, #tpu.memory_space<vmem>>, %arg12: memref<1x32xf32, #tpu.memory_space<vmem>>, %arg13: memref<1x32xf32, #tpu.memory_space<vmem>>, %arg14: memref<1x8x32xf32, #tpu.memory_space<vmem>>, %arg15: memref<8x32xf32, #tpu.memory_space<vmem>>) attributes {dimension_semantics = [#tpu.dimension_semantics<parallel>], iteration_bounds = array<i64: 2>, scalar_prefetch = 0 : i64, scratch_operands = 1 : i64, tpu.core_type = #tpu.core_type<tc>, window_params = [{transform_indices = @transform_0, window_bounds = array<i64: 1, 8, 32>}, {pipeline_mode = #tpu.pipeline_mode<synchronous>, transform_indices = @transform_1, window_bounds = array<i64: 32, 96>}, {pipeline_mode = #tpu.pipeline_mode<synchronous>, transform_indices = @transform_2, window_bounds = array<i64: 1, 96>}, {pipeline_mode = #tpu.pipeline_mode<synchronous>, transform_indices = @transform_3, window_bounds = array<i64: 32, 32>}, {pipeline_mode = #tpu.pipeline_mode<synchronous>, transform_indices = @transform_4, window_bounds = array<i64: 1, 32>}, {pipeline_mode = #tpu.pipeline_mode<synchronous>, transform_indices = @transform_5, window_bounds = array<i64: 1, 32>}, {pipeline_mode = #tpu.pipeline_mode<synchronous>, transform_indices = @transform_6, window_bounds = array<i64: 1, 32>}, {pipeline_mode = #tpu.pipeline_mode<synchronous>, transform_indices = @transform_7, window_bounds = array<i64: 32, 64>}, {pipeline_mode = #tpu.pipeline_mode<synchronous>, transform_indices = @transform_8, window_bounds = array<i64: 1, 64>}, {pipeline_mode = #tpu.pipeline_mode<synchronous>, transform_indices = @transform_9, window_bounds = array<i64: 64, 32>}, {pipeline_mode = #tpu.pipeline_mode<synchronous>, transform_indices = @transform_10, window_bounds = array<i64: 1, 32>}, {pipeline_mode = #tpu.pipeline_mode<synchronous>, transform_indices = @transform_11, window_bounds = array<i64: 1, 32>}, {pipeline_mode = #tpu.pipeline_mode<synchronous>, transform_indices = @transform_12, window_bounds = array<i64: 1, 32>}, {transform_indices = @transform_13, window_bounds = array<i64: 1, 8, 32>}]} {
    %c0 = arith.constant 0 : index
    %c0_0 = arith.constant 0 : index
    %c0_1 = arith.constant 0 : index
    %0 = vector.load %arg1[%c0, %c0_0, %c0_1] : memref<1x8x32xf32, #tpu.memory_space<vmem>>, vector<1x8x32xf32>
    %1 = vector.shape_cast %0 : vector<1x8x32xf32> to vector<8x32xf32>
    %2 = arith.truncf %1 : vector<8x32xf32> to vector<8x32xbf16>
    %c0_2 = arith.constant 0 : index
    %c0_3 = arith.constant 0 : index
    %3 = vector.load %arg2[%c0_2, %c0_3] : memref<32x96xbf16, #tpu.memory_space<vmem>>, vector<32x96xbf16>
    %cst = arith.constant dense<0.000000e+00> : vector<8x96xf32>
    %4 = tpu.matmul %2, %3, %cst {dimension_numbers = #tpu.dot_dimension_numbers<[1], [0], [0], [1], [0, 0, 1, 1], [], []>} : vector<8x32xbf16>, vector<32x96xbf16>, vector<8x96xf32> -> vector<8x96xf32>
    %c0_4 = arith.constant 0 : index
    %c0_5 = arith.constant 0 : index
    %5 = vector.load %arg3[%c0_4, %c0_5] : memref<1x96xf32, #tpu.memory_space<vmem>>, vector<1x96xf32>
    %6 = vector.broadcast %5 : vector<1x96xf32> to vector<8x96xf32>
    %7 = arith.addf %4, %6 : vector<8x96xf32>
    %8 = arith.truncf %7 : vector<8x96xf32> to vector<8x96xbf16>
    %9 = vector.extract_strided_slice %8 {offsets = [0, 0], sizes = [8, 8], strides = [1, 1]} : vector<8x96xbf16> to vector<8x8xbf16>
    %10 = vector.extract_strided_slice %8 {offsets = [0, 32], sizes = [8, 8], strides = [1, 1]} : vector<8x96xbf16> to vector<8x8xbf16>
    %11 = vector.extract_strided_slice %8 {offsets = [0, 64], sizes = [8, 8], strides = [1, 1]} : vector<8x96xbf16> to vector<8x8xbf16>
    %cst_6 = arith.constant dense<0.000000e+00> : vector<8x8xf32>
    %12 = tpu.matmul %9, %10, %cst_6 {dimension_numbers = #tpu.dot_dimension_numbers<[1], [1], [0], [0], [0, 0, 1, 0], [], []>} : vector<8x8xbf16>, vector<8x8xbf16>, vector<8x8xf32> -> vector<8x8xf32>
    %cst_7 = arith.constant dense<0xFF800000> : vector<8xf32>
    %13 = vector.multi_reduction <maximumf>, %12, %cst_7 [1] : vector<8x8xf32> to vector<8xf32>
    %14 = vector.shape_cast %13 : vector<8xf32> to vector<8x1xf32>
    %15 = vector.broadcast %14 : vector<8x1xf32> to vector<8x8xf32>
    %16 = arith.subf %12, %15 : vector<8x8xf32>
    %17 = math.exp %16 : vector<8x8xf32>
    %cst_8 = arith.constant dense<0.000000e+00> : vector<8xf32>
    %18 = vector.multi_reduction <add>, %17, %cst_8 [1] : vector<8x8xf32> to vector<8xf32>
    %19 = vector.shape_cast %18 : vector<8xf32> to vector<8x1xf32>
    %20 = tpu.reciprocal %19 {approx = true} : vector<8x1xf32> -> vector<8x1xf32>
    %21 = vector.broadcast %20 : vector<8x1xf32> to vector<8x8xf32>
    %22 = arith.mulf %17, %21 : vector<8x8xf32>
    %23 = arith.truncf %22 : vector<8x8xf32> to vector<8x8xbf16>
    %cst_9 = arith.constant dense<0.000000e+00> : vector<8x8xf32>
    %24 = tpu.matmul %23, %11, %cst_9 {dimension_numbers = #tpu.dot_dimension_numbers<[1], [0], [0], [1], [0, 0, 1, 1], [], []>} : vector<8x8xbf16>, vector<8x8xbf16>, vector<8x8xf32> -> vector<8x8xf32>
    %c0_10 = arith.constant 0 : index
    %c0_11 = arith.constant 0 : index
    %25 = vector.load %arg15[%c0_10, %c0_11] : memref<8x32xf32, #tpu.memory_space<vmem>>, vector<8x8xf32>
    tpu.vector_store %arg15[%c0_10, %c0_11], %24 {strides = array<i32>} : memref<8x32xf32, #tpu.memory_space<vmem>>, vector<8x8xf32>,
    %26 = vector.extract_strided_slice %8 {offsets = [0, 8], sizes = [8, 8], strides = [1, 1]} : vector<8x96xbf16> to vector<8x8xbf16>
    %27 = vector.extract_strided_slice %8 {offsets = [0, 40], sizes = [8, 8], strides = [1, 1]} : vector<8x96xbf16> to vector<8x8xbf16>
    %28 = vector.extract_strided_slice %8 {offsets = [0, 72], sizes = [8, 8], strides = [1, 1]} : vector<8x96xbf16> to vector<8x8xbf16>
    %cst_12 = arith.constant dense<0.000000e+00> : vector<8x8xf32>
    %29 = tpu.matmul %26, %27, %cst_12 {dimension_numbers = #tpu.dot_dimension_numbers<[1], [1], [0], [0], [0, 0, 1, 0], [], []>} : vector<8x8xbf16>, vector<8x8xbf16>, vector<8x8xf32> -> vector<8x8xf32>
    %cst_13 = arith.constant dense<0xFF800000> : vector<8xf32>
    %30 = vector.multi_reduction <maximumf>, %29, %cst_13 [1] : vector<8x8xf32> to vector<8xf32>
    %31 = vector.shape_cast %30 : vector<8xf32> to vector<8x1xf32>
    %32 = vector.broadcast %31 : vector<8x1xf32> to vector<8x8xf32>
    %33 = arith.subf %29, %32 : vector<8x8xf32>
    %34 = math.exp %33 : vector<8x8xf32>
    %cst_14 = arith.constant dense<0.000000e+00> : vector<8xf32>
    %35 = vector.multi_reduction <add>, %34, %cst_14 [1] : vector<8x8xf32> to vector<8xf32>
    %36 = vector.shape_cast %35 : vector<8xf32> to vector<8x1xf32>
    %37 = tpu.reciprocal %36 {approx = true} : vector<8x1xf32> -> vector<8x1xf32>
    %38 = vector.broadcast %37 : vector<8x1xf32> to vector<8x8xf32>
    %39 = arith.mulf %34, %38 : vector<8x8xf32>
    %40 = arith.truncf %39 : vector<8x8xf32> to vector<8x8xbf16>
    %cst_15 = arith.constant dense<0.000000e+00> : vector<8x8xf32>
    %41 = tpu.matmul %40, %28, %cst_15 {dimension_numbers = #tpu.dot_dimension_numbers<[1], [0], [0], [1], [0, 0, 1, 1], [], []>} : vector<8x8xbf16>, vector<8x8xbf16>, vector<8x8xf32> -> vector<8x8xf32>
    %c0_16 = arith.constant 0 : index
    %c8 = arith.constant 8 : index
    %42 = vector.load %arg15[%c0_16, %c8] : memref<8x32xf32, #tpu.memory_space<vmem>>, vector<8x8xf32>
    tpu.vector_store %arg15[%c0_16, %c8], %41 {strides = array<i32>} : memref<8x32xf32, #tpu.memory_space<vmem>>, vector<8x8xf32>,
    %43 = vector.extract_strided_slice %8 {offsets = [0, 16], sizes = [8, 8], strides = [1, 1]} : vector<8x96xbf16> to vector<8x8xbf16>
    %44 = vector.extract_strided_slice %8 {offsets = [0, 48], sizes = [8, 8], strides = [1, 1]} : vector<8x96xbf16> to vector<8x8xbf16>
    %45 = vector.extract_strided_slice %8 {offsets = [0, 80], sizes = [8, 8], strides = [1, 1]} : vector<8x96xbf16> to vector<8x8xbf16>
    %cst_17 = arith.constant dense<0.000000e+00> : vector<8x8xf32>
    %46 = tpu.matmul %43, %44, %cst_17 {dimension_numbers = #tpu.dot_dimension_numbers<[1], [1], [0], [0], [0, 0, 1, 0], [], []>} : vector<8x8xbf16>, vector<8x8xbf16>, vector<8x8xf32> -> vector<8x8xf32>
    %cst_18 = arith.constant dense<0xFF800000> : vector<8xf32>
    %47 = vector.multi_reduction <maximumf>, %46, %cst_18 [1] : vector<8x8xf32> to vector<8xf32>
    %48 = vector.shape_cast %47 : vector<8xf32> to vector<8x1xf32>
    %49 = vector.broadcast %48 : vector<8x1xf32> to vector<8x8xf32>
    %50 = arith.subf %46, %49 : vector<8x8xf32>
    %51 = math.exp %50 : vector<8x8xf32>
    %cst_19 = arith.constant dense<0.000000e+00> : vector<8xf32>
    %52 = vector.multi_reduction <add>, %51, %cst_19 [1] : vector<8x8xf32> to vector<8xf32>
    %53 = vector.shape_cast %52 : vector<8xf32> to vector<8x1xf32>
    %54 = tpu.reciprocal %53 {approx = true} : vector<8x1xf32> -> vector<8x1xf32>
    %55 = vector.broadcast %54 : vector<8x1xf32> to vector<8x8xf32>
    %56 = arith.mulf %51, %55 : vector<8x8xf32>
    %57 = arith.truncf %56 : vector<8x8xf32> to vector<8x8xbf16>
    %cst_20 = arith.constant dense<0.000000e+00> : vector<8x8xf32>
    %58 = tpu.matmul %57, %45, %cst_20 {dimension_numbers = #tpu.dot_dimension_numbers<[1], [0], [0], [1], [0, 0, 1, 1], [], []>} : vector<8x8xbf16>, vector<8x8xbf16>, vector<8x8xf32> -> vector<8x8xf32>
    %c0_21 = arith.constant 0 : index
    %c16 = arith.constant 16 : index
    %59 = vector.load %arg15[%c0_21, %c16] : memref<8x32xf32, #tpu.memory_space<vmem>>, vector<8x8xf32>
    tpu.vector_store %arg15[%c0_21, %c16], %58 {strides = array<i32>} : memref<8x32xf32, #tpu.memory_space<vmem>>, vector<8x8xf32>,
    %60 = vector.extract_strided_slice %8 {offsets = [0, 24], sizes = [8, 8], strides = [1, 1]} : vector<8x96xbf16> to vector<8x8xbf16>
    %61 = vector.extract_strided_slice %8 {offsets = [0, 56], sizes = [8, 8], strides = [1, 1]} : vector<8x96xbf16> to vector<8x8xbf16>
    %62 = vector.extract_strided_slice %8 {offsets = [0, 88], sizes = [8, 8], strides = [1, 1]} : vector<8x96xbf16> to vector<8x8xbf16>
    %cst_22 = arith.constant dense<0.000000e+00> : vector<8x8xf32>
    %63 = tpu.matmul %60, %61, %cst_22 {dimension_numbers = #tpu.dot_dimension_numbers<[1], [1], [0], [0], [0, 0, 1, 0], [], []>} : vector<8x8xbf16>, vector<8x8xbf16>, vector<8x8xf32> -> vector<8x8xf32>
    %cst_23 = arith.constant dense<0xFF800000> : vector<8xf32>
    %64 = vector.multi_reduction <maximumf>, %63, %cst_23 [1] : vector<8x8xf32> to vector<8xf32>
    %65 = vector.shape_cast %64 : vector<8xf32> to vector<8x1xf32>
    %66 = vector.broadcast %65 : vector<8x1xf32> to vector<8x8xf32>
    %67 = arith.subf %63, %66 : vector<8x8xf32>
    %68 = math.exp %67 : vector<8x8xf32>
    %cst_24 = arith.constant dense<0.000000e+00> : vector<8xf32>
    %69 = vector.multi_reduction <add>, %68, %cst_24 [1] : vector<8x8xf32> to vector<8xf32>
    %70 = vector.shape_cast %69 : vector<8xf32> to vector<8x1xf32>
    %71 = tpu.reciprocal %70 {approx = true} : vector<8x1xf32> -> vector<8x1xf32>
    %72 = vector.broadcast %71 : vector<8x1xf32> to vector<8x8xf32>
    %73 = arith.mulf %68, %72 : vector<8x8xf32>
    %74 = arith.truncf %73 : vector<8x8xf32> to vector<8x8xbf16>
    %cst_25 = arith.constant dense<0.000000e+00> : vector<8x8xf32>
    %75 = tpu.matmul %74, %62, %cst_25 {dimension_numbers = #tpu.dot_dimension_numbers<[1], [0], [0], [1], [0, 0, 1, 1], [], []>} : vector<8x8xbf16>, vector<8x8xbf16>, vector<8x8xf32> -> vector<8x8xf32>
    %c0_26 = arith.constant 0 : index
    %c24 = arith.constant 24 : index
    %76 = vector.load %arg15[%c0_26, %c24] : memref<8x32xf32, #tpu.memory_space<vmem>>, vector<8x8xf32>
    tpu.vector_store %arg15[%c0_26, %c24], %75 {strides = array<i32>} : memref<8x32xf32, #tpu.memory_space<vmem>>, vector<8x8xf32>,
    %c0_27 = arith.constant 0 : index
    %c0_28 = arith.constant 0 : index
    %77 = vector.load %arg15[%c0_27, %c0_28] : memref<8x32xf32, #tpu.memory_space<vmem>>, vector<8x32xf32>
    %78 = arith.truncf %77 : vector<8x32xf32> to vector<8x32xbf16>
    %c0_29 = arith.constant 0 : index
    %c0_30 = arith.constant 0 : index
    %79 = vector.load %arg4[%c0_29, %c0_30] : memref<32x32xbf16, #tpu.memory_space<vmem>>, vector<32x32xbf16>
    %cst_31 = arith.constant dense<0.000000e+00> : vector<8x32xf32>
    %80 = tpu.matmul %78, %79, %cst_31 {dimension_numbers = #tpu.dot_dimension_numbers<[1], [0], [0], [1], [0, 0, 1, 1], [], []>} : vector<8x32xbf16>, vector<32x32xbf16>, vector<8x32xf32> -> vector<8x32xf32>
    %c0_32 = arith.constant 0 : index
    %c0_33 = arith.constant 0 : index
    %81 = vector.load %arg5[%c0_32, %c0_33] : memref<1x32xf32, #tpu.memory_space<vmem>>, vector<1x32xf32>
    %82 = vector.broadcast %81 : vector<1x32xf32> to vector<8x32xf32>
    %83 = arith.addf %80, %82 : vector<8x32xf32>
    %84 = arith.addf %1, %83 : vector<8x32xf32>
    %c0_34 = arith.constant 0 : index
    %c0_35 = arith.constant 0 : index
    %85 = vector.load %arg6[%c0_34, %c0_35] : memref<1x32xf32, #tpu.memory_space<vmem>>, vector<1x32xf32>
    %c0_36 = arith.constant 0 : index
    %c0_37 = arith.constant 0 : index
    %86 = vector.load %arg7[%c0_36, %c0_37] : memref<1x32xf32, #tpu.memory_space<vmem>>, vector<1x32xf32>
    %cst_38 = arith.constant dense<0.000000e+00> : vector<8xf32>
    %87 = vector.multi_reduction <add>, %84, %cst_38 [1] : vector<8x32xf32> to vector<8xf32>
    %88 = vector.shape_cast %87 : vector<8xf32> to vector<8x1xf32>
    %cst_39 = arith.constant 3.200000e+01 : f32
    %89 = vector.broadcast %cst_39 : f32 to vector<8x1xf32>
    %90 = arith.divf %88, %89 : vector<8x1xf32>
    %91 = vector.broadcast %90 : vector<8x1xf32> to vector<8x32xf32>
    %92 = arith.subf %84, %91 : vector<8x32xf32>
    %93 = arith.mulf %92, %92 : vector<8x32xf32>
    %cst_40 = arith.constant dense<0.000000e+00> : vector<8xf32>
    %94 = vector.multi_reduction <add>, %93, %cst_40 [1] : vector<8x32xf32> to vector<8xf32>
    %95 = vector.shape_cast %94 : vector<8xf32> to vector<8x1xf32>
    %cst_41 = arith.constant 0.0322580636 : f32
    %96 = vector.broadcast %cst_41 : f32 to vector<8x1xf32>
    %97 = arith.mulf %95, %96 : vector<8x1xf32>
    %98 = math.sqrt %97 : vector<8x1xf32>
    %cst_42 = arith.constant 9.99999997E-7 : f32
    %99 = vector.broadcast %cst_42 : f32 to vector<8x1xf32>
    %100 = arith.addf %98, %99 : vector<8x1xf32>
    %101 = tpu.reciprocal %100 {approx = true} : vector<8x1xf32> -> vector<8x1xf32>
    %102 = vector.broadcast %101 : vector<8x1xf32> to vector<8x32xf32>
    %103 = arith.mulf %92, %102 : vector<8x32xf32>
    %104 = vector.broadcast %85 : vector<1x32xf32> to vector<8x32xf32>
    %105 = arith.mulf %104, %103 : vector<8x32xf32>
    %106 = vector.broadcast %86 : vector<1x32xf32> to vector<8x32xf32>
    %107 = arith.addf %105, %106 : vector<8x32xf32>
    %108 = arith.truncf %107 : vector<8x32xf32> to vector<8x32xbf16>
    %c0_43 = arith.constant 0 : index
    %c0_44 = arith.constant 0 : index
    %109 = vector.load %arg8[%c0_43, %c0_44] : memref<32x64xbf16, #tpu.memory_space<vmem>>, vector<32x64xbf16>
    %cst_45 = arith.constant dense<0.000000e+00> : vector<8x64xf32>
    %110 = tpu.matmul %108, %109, %cst_45 {dimension_numbers = #tpu.dot_dimension_numbers<[1], [0], [0], [1], [0, 0, 1, 1], [], []>} : vector<8x32xbf16>, vector<32x64xbf16>, vector<8x64xf32> -> vector<8x64xf32>
    %c0_46 = arith.constant 0 : index
    %c0_47 = arith.constant 0 : index
    %111 = vector.load %arg9[%c0_46, %c0_47] : memref<1x64xf32, #tpu.memory_space<vmem>>, vector<1x64xf32>
    %112 = vector.broadcast %111 : vector<1x64xf32> to vector<8x64xf32>
    %113 = arith.addf %110, %112 : vector<8x64xf32>
    %cst_48 = arith.constant 0.000000e+00 : f32
    %114 = vector.broadcast %cst_48 : f32 to vector<8x64xf32>
    %115 = arith.maximumf %113, %114 : vector<8x64xf32>
    %116 = arith.truncf %115 : vector<8x64xf32> to vector<8x64xbf16>
    %c0_49 = arith.constant 0 : index
    %c0_50 = arith.constant 0 : index
    %117 = vector.load %arg10[%c0_49, %c0_50] : memref<64x32xbf16, #tpu.memory_space<vmem>>, vector<64x32xbf16>
    %cst_51 = arith.constant dense<0.000000e+00> : vector<8x32xf32>
    %118 = tpu.matmul %116, %117, %cst_51 {dimension_numbers = #tpu.dot_dimension_numbers<[1], [0], [0], [1], [0, 0, 1, 1], [], []>} : vector<8x64xbf16>, vector<64x32xbf16>, vector<8x32xf32> -> vector<8x32xf32>
    %c0_52 = arith.constant 0 : index
    %c0_53 = arith.constant 0 : index
    %119 = vector.load %arg11[%c0_52, %c0_53] : memref<1x32xf32, #tpu.memory_space<vmem>>, vector<1x32xf32>
    %120 = vector.broadcast %119 : vector<1x32xf32> to vector<8x32xf32>
    %121 = arith.addf %118, %120 : vector<8x32xf32>
    %122 = arith.addf %107, %121 : vector<8x32xf32>
    %c0_54 = arith.constant 0 : index
    %c0_55 = arith.constant 0 : index
    %123 = vector.load %arg12[%c0_54, %c0_55] : memref<1x32xf32, #tpu.memory_space<vmem>>, vector<1x32xf32>
    %c0_56 = arith.constant 0 : index
    %c0_57 = arith.constant 0 : index
    %124 = vector.load %arg13[%c0_56, %c0_57] : memref<1x32xf32, #tpu.memory_space<vmem>>, vector<1x32xf32>
    %cst_58 = arith.constant dense<0.000000e+00> : vector<8xf32>
    %125 = vector.multi_reduction <add>, %122, %cst_58 [1] : vector<8x32xf32> to vector<8xf32>
    %126 = vector.shape_cast %125 : vector<8xf32> to vector<8x1xf32>
    %cst_59 = arith.constant 3.200000e+01 : f32
    %127 = vector.broadcast %cst_59 : f32 to vector<8x1xf32>
    %128 = arith.divf %126, %127 : vector<8x1xf32>
    %129 = vector.broadcast %128 : vector<8x1xf32> to vector<8x32xf32>
    %130 = arith.subf %122, %129 : vector<8x32xf32>
    %131 = arith.mulf %130, %130 : vector<8x32xf32>
    %cst_60 = arith.constant dense<0.000000e+00> : vector<8xf32>
    %132 = vector.multi_reduction <add>, %131, %cst_60 [1] : vector<8x32xf32> to vector<8xf32>
    %133 = vector.shape_cast %132 : vector<8xf32> to vector<8x1xf32>
    %cst_61 = arith.constant 0.0322580636 : f32
    %134 = vector.broadcast %cst_61 : f32 to vector<8x1xf32>
    %135 = arith.mulf %133, %134 : vector<8x1xf32>
    %136 = math.sqrt %135 : vector<8x1xf32>
    %cst_62 = arith.constant 9.99999997E-7 : f32
    %137 = vector.broadcast %cst_62 : f32 to vector<8x1xf32>
    %138 = arith.addf %136, %137 : vector<8x1xf32>
    %139 = tpu.reciprocal %138 {approx = true} : vector<8x1xf32> -> vector<8x1xf32>
    %140 = vector.broadcast %139 : vector<8x1xf32> to vector<8x32xf32>
    %141 = arith.mulf %130, %140 : vector<8x32xf32>
    %142 = vector.broadcast %123 : vector<1x32xf32> to vector<8x32xf32>
    %143 = arith.mulf %142, %141 : vector<8x32xf32>
    %144 = vector.broadcast %124 : vector<1x32xf32> to vector<8x32xf32>
    %145 = arith.addf %143, %144 : vector<8x32xf32>
    %c0_63 = arith.constant 0 : index
    %c0_64 = arith.constant 0 : index
    %c0_65 = arith.constant 0 : index
    %146 = vector.load %arg14[%c0_63, %c0_64, %c0_65] : memref<1x8x32xf32, #tpu.memory_space<vmem>>, vector<1x8x32xf32>
    %147 = vector.shape_cast %146 : vector<1x8x32xf32> to vector<8x32xf32>
    %148 = vector.shape_cast %145 : vector<8x32xf32> to vector<1x8x32xf32>
    tpu.vector_store %arg14[%c0_63, %c0_64, %c0_65], %148 {strides = array<i32>} : memref<1x8x32xf32, #tpu.memory_space<vmem>>, vector<1x8x32xf32>,
    return
  }
  func.func @transform_0(%arg0: i32) -> (i32, i32, i32) {
    %c0_i32 = arith.constant 0 : i32
    %c0_i32_0 = arith.constant 0 : i32
    %c0_i32_1 = arith.constant 0 : i32
    return %arg0, %c0_i32, %c0_i32_0 : i32, i32, i32
  }
  func.func @transform_1(%arg0: i32) -> (i32, i32) {
    %c0_i32 = arith.constant 0 : i32
    %c0_i32_0 = arith.constant 0 : i32
    %c0_i32_1 = arith.constant 0 : i32
    return %c0_i32, %c0_i32_0 : i32, i32
  }
  func.func @transform_2(%arg0: i32) -> (i32, i32) {
    %c0_i32 = arith.constant 0 : i32
    %c0_i32_0 = arith.constant 0 : i32
    %c0_i32_1 = arith.constant 0 : i32
    return %c0_i32, %c0_i32_0 : i32, i32
  }
  func.func @transform_3(%arg0: i32) -> (i32, i32) {
    %c0_i32 = arith.constant 0 : i32
    %c0_i32_0 = arith.constant 0 : i32
    %c0_i32_1 = arith.constant 0 : i32
    return %c0_i32, %c0_i32_0 : i32, i32
  }
  func.func @transform_4(%arg0: i32) -> (i32, i32) {
    %c0_i32 = arith.constant 0 : i32
    %c0_i32_0 = arith.constant 0 : i32
    %c0_i32_1 = arith.constant 0 : i32
    return %c0_i32, %c0_i32_0 : i32, i32
  }
  func.func @transform_5(%arg0: i32) -> (i32, i32) {
    %c0_i32 = arith.constant 0 : i32
    %c0_i32_0 = arith.constant 0 : i32
    %c0_i32_1 = arith.constant 0 : i32
    return %c0_i32, %c0_i32_0 : i32, i32
  }
  func.func @transform_6(%arg0: i32) -> (i32, i32) {
    %c0_i32 = arith.constant 0 : i32
    %c0_i32_0 = arith.constant 0 : i32
    %c0_i32_1 = arith.constant 0 : i32
    return %c0_i32, %c0_i32_0 : i32, i32
  }
  func.func @transform_7(%arg0: i32) -> (i32, i32) {
    %c0_i32 = arith.constant 0 : i32
    %c0_i32_0 = arith.constant 0 : i32
    %c0_i32_1 = arith.constant 0 : i32
    return %c0_i32, %c0_i32_0 : i32, i32
  }
  func.func @transform_8(%arg0: i32) -> (i32, i32) {
    %c0_i32 = arith.constant 0 : i32
    %c0_i32_0 = arith.constant 0 : i32
    %c0_i32_1 = arith.constant 0 : i32
    return %c0_i32, %c0_i32_0 : i32, i32
  }
  func.func @transform_9(%arg0: i32) -> (i32, i32) {
    %c0_i32 = arith.constant 0 : i32
    %c0_i32_0 = arith.constant 0 : i32
    %c0_i32_1 = arith.constant 0 : i32
    return %c0_i32, %c0_i32_0 : i32, i32
  }
  func.func @transform_10(%arg0: i32) -> (i32, i32) {
    %c0_i32 = arith.constant 0 : i32
    %c0_i32_0 = arith.constant 0 : i32
    %c0_i32_1 = arith.constant 0 : i32
    return %c0_i32, %c0_i32_0 : i32, i32
  }
  func.func @transform_11(%arg0: i32) -> (i32, i32) {
    %c0_i32 = arith.constant 0 : i32
    %c0_i32_0 = arith.constant 0 : i32
    %c0_i32_1 = arith.constant 0 : i32
    return %c0_i32, %c0_i32_0 : i32, i32
  }
  func.func @transform_12(%arg0: i32) -> (i32, i32) {
    %c0_i32 = arith.constant 0 : i32
    %c0_i32_0 = arith.constant 0 : i32
    %c0_i32_1 = arith.constant 0 : i32
    return %c0_i32, %c0_i32_0 : i32, i32
  }
  func.func @transform_13(%arg0: i32) -> (i32, i32, i32) {
    %c0_i32 = arith.constant 0 : i32
    %c0_i32_0 = arith.constant 0 : i32
    %c0_i32_1 = arith.constant 0 : i32
    return %arg0, %c0_i32, %c0_i32_0 : i32, i32, i32
  }
}

</mosaic_0001>

<llo_original>
// kernel: encoder_layer_forward.1
$region0: #{encoder_layer_forward.1}
  #allocation0 [shape = 'u32[]', space=smem, size = 0x4, offset = 0x4, fixed_abs, tag = 'smem constant byte address 0x4 - core index']
  #allocation1 [shape = 'u32[72,128]{1,0:T(1,128)}', space=vmem, size = 0x9000, scoped, tag = 'internal scratch']
  #allocation2 [shape = 'f32[8,32]{1,0:T(8,128)}', space=vmem, size = 0x1000, scoped, tag = 'scratch operand']
  %s0 = inlined_call_operand.vmem [shape: f32[2,8,32], index: 0, kind: input, shape index: {}]
  %s1 = inlined_call_operand.vmem [shape: bf16[32,96], index: 1, kind: input, shape index: {}]
  %s2 = inlined_call_operand.vmem [shape: f32[1,96], index: 2, kind: input, shape index: {}]
  %s3 = inlined_call_operand.vmem [shape: bf16[32,32], index: 3, kind: input, shape index: {}]
  %s4 = inlined_call_operand.hbm [shape: f32[1,32], index: 4, kind: input, shape index: {}]
  %s5 = inlined_call_operand.vmem [shape: f32[1,32], index: 5, kind: input, shape index: {}]
  %s6 = inlined_call_operand.vmem [shape: f32[1,32], index: 6, kind: input, shape index: {}]
  %s7 = inlined_call_operand.hbm [shape: bf16[32,64], index: 7, kind: input, shape index: {}]
  %s8 = inlined_call_operand.hbm [shape: f32[1,64], index: 8, kind: input, shape index: {}]
  %s9 = inlined_call_operand.vmem [shape: bf16[64,32], index: 9, kind: input, shape index: {}]
  %s10 = inlined_call_operand.hbm [shape: f32[1,32], index: 10, kind: input, shape index: {}]
  %s11 = inlined_call_operand.vmem [shape: f32[1,32], index: 11, kind: input, shape index: {}]
  %s12 = inlined_call_operand.vmem [shape: f32[1,32], index: 12, kind: input, shape index: {}]
  %s13 = inlined_call_operand.hbm [shape: f32[2,8,32], index: 13, kind: output, shape index: {}]
  %s14 = sld [smem:[#allocation0]]
  $region101: #{encoder_layer_forward.1} parent=0
    _
  %s16 = ssub.s32 1, %s14
  %s17 = scalar_select 0, %s16, %s14
  $region1: #{encoder_layer_forward.1} parent=0
    #allocation3 [shape = 'u8[512]{0}', space=vmem, size = 0x400, scoped, tag = 'input window, operand 4, single buffered']
    #allocation4 [shape = 's32[2]{0}', space=sflag, size = 0x8, scoped, tag = 'scoped memory for encoder_layer_forward.1']
    #allocation5 [shape = 's32[2]{0}', space=sflag, size = 0x8, scoped, tag = 'scoped memory for encoder_layer_forward.1']
    #allocation6 [shape = 'u8[8192]{0}', space=vmem, size = 0x2000, scoped, tag = 'input window, operand 7, single buffered']
    #allocation7 [shape = 's32[1]{0}', space=sflag, size = 0x4, scoped, tag = 'scoped memory for encoder_layer_forward.1']
    #allocation8 [shape = 'u8[512]{0}', space=vmem, size = 0x400, scoped, tag = 'input window, operand 8, single buffered']
    #allocation9 [shape = 'u8[512]{0}', space=vmem, size = 0x400, scoped, tag = 'input window, operand 10, single buffered']
    #allocation10 [shape = 's32[1]{0}', space=sflag, size = 0x4, scoped, tag = 'scoped memory for encoder_layer_forward.1']
    #allocation11 [shape = 'u8[8192]{0}', space=vmem, size = 0x2000, scoped, tag = 'output window, operand 0']
    %18 = vsyncpa [#allocation4], 0
    %19 = vsyncpa [#allocation7], 0
    %20 = vsyncpa [#allocation10], 0
    %21 = vsyncpa [#allocation5], 0
    %s22 = scalar_lea.sflag [#allocation5], 1
    %23 = vsyncpa %s22, 0
    loop: start=0, step=1, limit=4
    $region2: #{encoder_layer_forward.1} parent=1 // loop_pre_header
      _
    $region3: #{encoder_layer_forward.1} parent=1 // loop_header
      %s25 = sphi 0, %s29
      %p26 = scmp.ge.s32.totalorder %s25, 4
      %s35 = sphi 0, %s37
      %s38 = sphi 0, %s35
      %s39 = sphi 0, %s38
      %s55 = sphi 0, %s39
      %s59 = sphi 0, %s59
      %s61 = sphi 0, %s59
      %s62 = sphi 0, %s61
      %s76 = sphi 0, %s62
      %s80 = sphi 0, %s80
      %s82 = sphi 0, %s80
      %s83 = sphi 0, %s82
      %s97 = sphi 0, %s83
      %s101 = sphi 0, %s101
      %s103 = sphi 0, %s101
      %s104 = sphi 0, %s103
      %s118 = sphi 0, %s104
      %s122 = sphi 0, %s122
      %s124 = sphi 0, %s122
      %s125 = sphi 0, %s124
      %s139 = sphi 0, %s125
      %s143 = sphi 0, %s143
      %s145 = sphi 0, %s143
      %s146 = sphi 0, %s145
      %s160 = sphi 0, %s146
      %s164 = sphi 0, %s164
      %s166 = sphi 0, %s164
      %s167 = sphi 0, %s166
      %s181 = sphi 0, %s167
      %s185 = sphi 0, %s185
      %s187 = sphi 0, %s185
      %s188 = sphi 0, %s187
      %s202 = sphi 0, %s188
      %s206 = sphi 0, %s206
      %s208 = sphi 0, %s206
      %s209 = sphi 0, %s208
      %s223 = sphi 0, %s209
      %s227 = sphi 0, %s227
      %s229 = sphi 0, %s227
      %s230 = sphi 0, %s229
      %s244 = sphi 0, %s230
      %s248 = sphi 0, %s248
      %s250 = sphi 0, %s248
      %s251 = sphi 0, %s250
      %s265 = sphi 0, %s251
      %s269 = sphi 0, %s269
      %s271 = sphi 0, %s269
      %s272 = sphi 0, %s271
      %s286 = sphi 0, %s272
      %s290 = sphi 0, %s290
      %s292 = sphi 0, %s290
      %s293 = sphi 0, %s292
      %s307 = sphi 0, %s293
      %s313 = sphi 0, %s315
      %s316 = sphi 0, %s313
      %s317 = sphi 0, %s316
      %s333 = sphi 0, %s317
    $region4: #{encoder_layer_forward.1} parent=1 // loop_header_branch
      %28 = sbr.rel (%p26) target = $region8
    $region5: #{encoder_layer_forward.1} parent=1 // loop_body
      %s30 = ssub.s32 %s25, 1
      %s31 = ssub.s32 %s25, 2
      %s32 = sadd.s32 %s25, 1
      %s33 = ssub.s32 %s25, %s32
      %p34 = scmp.eq.s32.totalorder %s33, 0
      %s36 = sadd.s32 %s35, 1
      %s37 = scalar_select %p34, %s35, %s36
      %p40 = pneg %p34
      %p41 = scmp.eq.s32.totalorder %s25, 1
      %p42 = por %p40, %p41
      %p43 = scmp.ne.s32.totalorder %s35, %s38
      %p44 = scmp.eq.s32.totalorder %s25, 0
      %p45 = por %p43, %p44
      %p46 = scmp.ne.s32.totalorder %s35, %s38
      %p47 = scmp.eq.s32.totalorder %s30, 1
      %p48 = por %p46, %p47
      %p49 = scmp.ne.s32.totalorder %s38, %s39
      %p50 = scmp.eq.s32.totalorder %s30, 0
      %p51 = por %p49, %p50
      %p52 = scmp.ne.s32.totalorder %s38, %s39
      %p53 = scmp.eq.s32.totalorder %s31, 1
      %p54 = por %p52, %p53
      %p56 = scmp.ne.s32.totalorder %s39, %s55
      %p57 = scmp.eq.s32.totalorder %s31, 0
      %p58 = por %p56, %p57
      %s60 = sadd.s32 %s59, 1
      %p63 = scmp.eq.s32.totalorder %s25, 1
      %p64 = scmp.ne.s32.totalorder %s59, %s61
      %p65 = scmp.eq.s32.totalorder %s25, 0
      %p66 = por %p64, %p65
      %p67 = scmp.ne.s32.totalorder %s59, %s61
      %p68 = scmp.eq.s32.totalorder %s30, 1
      %p69 = por %p67, %p68
      %p70 = scmp.ne.s32.totalorder %s61, %s62
      %p71 = scmp.eq.s32.totalorder %s30, 0
      %p72 = por %p70, %p71
      %p73 = scmp.ne.s32.totalorder %s61, %s62
      %p74 = scmp.eq.s32.totalorder %s31, 1
      %p75 = por %p73, %p74
      %p77 = scmp.ne.s32.totalorder %s62, %s76
      %p78 = scmp.eq.s32.totalorder %s31, 0
      %p79 = por %p77, %p78
      %s81 = sadd.s32 %s80, 1
      %p84 = scmp.eq.s32.totalorder %s25, 1
      %p85 = scmp.ne.s32.totalorder %s80, %s82
      %p86 = scmp.eq.s32.totalorder %s25, 0
      %p87 = por %p85, %p86
      %p88 = scmp.ne.s32.totalorder %s80, %s82
      %p89 = scmp.eq.s32.totalorder %s30, 1
      %p90 = por %p88, %p89
      %p91 = scmp.ne.s32.totalorder %s82, %s83
      %p92 = scmp.eq.s32.totalorder %s30, 0
      %p93 = por %p91, %p92
      %p94 = scmp.ne.s32.totalorder %s82, %s83
      %p95 = scmp.eq.s32.totalorder %s31, 1
      %p96 = por %p94, %p95
      %p98 = scmp.ne.s32.totalorder %s83, %s97
      %p99 = scmp.eq.s32.totalorder %s31, 0
      %p100 = por %p98, %p99
      %s102 = sadd.s32 %s101, 1
      %p105 = scmp.eq.s32.totalorder %s25, 1
      %p106 = scmp.ne.s32.totalorder %s101, %s103
      %p107 = scmp.eq.s32.totalorder %s25, 0
      %p108 = por %p106, %p107
      %p109 = scmp.ne.s32.totalorder %s101, %s103
      %p110 = scmp.eq.s32.totalorder %s30, 1
      %p111 = por %p109, %p110
      %p112 = scmp.ne.s32.totalorder %s103, %s104
      %p113 = scmp.eq.s32.totalorder %s30, 0
      %p114 = por %p112, %p113
      %p115 = scmp.ne.s32.totalorder %s103, %s104
      %p116 = scmp.eq.s32.totalorder %s31, 1
      %p117 = por %p115, %p116
      %p119 = scmp.ne.s32.totalorder %s104, %s118
      %p120 = scmp.eq.s32.totalorder %s31, 0
      %p121 = por %p119, %p120
      %s123 = sadd.s32 %s122, 1
      %p126 = scmp.eq.s32.totalorder %s25, 1
      %p127 = scmp.ne.s32.totalorder %s122, %s124
      %p128 = scmp.eq.s32.totalorder %s25, 0
      %p129 = por %p127, %p128
      %p130 = scmp.ne.s32.totalorder %s122, %s124
      %p131 = scmp.eq.s32.totalorder %s30, 1
      %p132 = por %p130, %p131
      %p133 = scmp.ne.s32.totalorder %s124, %s125
      %p134 = scmp.eq.s32.totalorder %s30, 0
      %p135 = por %p133, %p134
      %p136 = scmp.ne.s32.totalorder %s124, %s125
      %p137 = scmp.eq.s32.totalorder %s31, 1
      %p138 = por %p136, %p137
      %p140 = scmp.ne.s32.totalorder %s125, %s139
      %p141 = scmp.eq.s32.totalorder %s31, 0
      %p142 = por %p140, %p141
      %s144 = sadd.s32 %s143, 1
      %p147 = scmp.eq.s32.totalorder %s25, 1
      %p148 = scmp.ne.s32.totalorder %s143, %s145
      %p149 = scmp.eq.s32.totalorder %s25, 0
      %p150 = por %p148, %p149
      %p151 = scmp.ne.s32.totalorder %s143, %s145
      %p152 = scmp.eq.s32.totalorder %s30, 1
      %p153 = por %p151, %p152
      %p154 = scmp.ne.s32.totalorder %s145, %s146
      %p155 = scmp.eq.s32.totalorder %s30, 0
      %p156 = por %p154, %p155
      %p157 = scmp.ne.s32.totalorder %s145, %s146
      %p158 = scmp.eq.s32.totalorder %s31, 1
      %p159 = por %p157, %p158
      %p161 = scmp.ne.s32.totalorder %s146, %s160
      %p162 = scmp.eq.s32.totalorder %s31, 0
      %p163 = por %p161, %p162
      %s165 = sadd.s32 %s164, 1
      %p168 = scmp.eq.s32.totalorder %s25, 1
      %p169 = scmp.ne.s32.totalorder %s164, %s166
      %p170 = scmp.eq.s32.totalorder %s25, 0
      %p171 = por %p169, %p170
      %p172 = scmp.ne.s32.totalorder %s164, %s166
      %p173 = scmp.eq.s32.totalorder %s30, 1
      %p174 = por %p172, %p173
      %p175 = scmp.ne.s32.totalorder %s166, %s167
      %p176 = scmp.eq.s32.totalorder %s30, 0
      %p177 = por %p175, %p176
      %p178 = scmp.ne.s32.totalorder %s166, %s167
      %p179 = scmp.eq.s32.totalorder %s31, 1
      %p180 = por %p178, %p179
      %p182 = scmp.ne.s32.totalorder %s167, %s181
      %p183 = scmp.eq.s32.totalorder %s31, 0
      %p184 = por %p182, %p183
      %s186 = sadd.s32 %s185, 1
      %p189 = scmp.eq.s32.totalorder %s25, 1
      %p190 = scmp.ne.s32.totalorder %s185, %s187
      %p191 = scmp.eq.s32.totalorder %s25, 0
      %p192 = por %p190, %p191
      %p193 = scmp.ne.s32.totalorder %s185, %s187
      %p194 = scmp.eq.s32.totalorder %s30, 1
      %p195 = por %p193, %p194
      %p196 = scmp.ne.s32.totalorder %s187, %s188
      %p197 = scmp.eq.s32.totalorder %s30, 0
      %p198 = por %p196, %p197
      %p199 = scmp.ne.s32.totalorder %s187, %s188
      %p200 = scmp.eq.s32.totalorder %s31, 1
      %p201 = por %p199, %p200
      %p203 = scmp.ne.s32.totalorder %s188, %s202
      %p204 = scmp.eq.s32.totalorder %s31, 0
      %p205 = por %p203, %p204
      %s207 = sadd.s32 %s206, 1
      %p210 = scmp.eq.s32.totalorder %s25, 1
      %p211 = scmp.ne.s32.totalorder %s206, %s208
      %p212 = scmp.eq.s32.totalorder %s25, 0
      %p213 = por %p211, %p212
      %p214 = scmp.ne.s32.totalorder %s206, %s208
      %p215 = scmp.eq.s32.totalorder %s30, 1
      %p216 = por %p214, %p215
      %p217 = scmp.ne.s32.totalorder %s208, %s209
      %p218 = scmp.eq.s32.totalorder %s30, 0
      %p219 = por %p217, %p218
      %p220 = scmp.ne.s32.totalorder %s208, %s209
      %p221 = scmp.eq.s32.totalorder %s31, 1
      %p222 = por %p220, %p221
      %p224 = scmp.ne.s32.totalorder %s209, %s223
      %p225 = scmp.eq.s32.totalorder %s31, 0
      %p226 = por %p224, %p225
      %s228 = sadd.s32 %s227, 1
      %p231 = scmp.eq.s32.totalorder %s25, 1
      %p232 = scmp.ne.s32.totalorder %s227, %s229
      %p233 = scmp.eq.s32.totalorder %s25, 0
      %p234 = por %p232, %p233
      %p235 = scmp.ne.s32.totalorder %s227, %s229
      %p236 = scmp.eq.s32.totalorder %s30, 1
      %p237 = por %p235, %p236
      %p238 = scmp.ne.s32.totalorder %s229, %s230
      %p239 = scmp.eq.s32.totalorder %s30, 0
      %p240 = por %p238, %p239
      %p241 = scmp.ne.s32.totalorder %s229, %s230
      %p242 = scmp.eq.s32.totalorder %s31, 1
      %p243 = por %p241, %p242
      %p245 = scmp.ne.s32.totalorder %s230, %s244
      %p246 = scmp.eq.s32.totalorder %s31, 0
      %p247 = por %p245, %p246
      %s249 = sadd.s32 %s248, 1
      %p252 = scmp.eq.s32.totalorder %s25, 1
      %p253 = scmp.ne.s32.totalorder %s248, %s250
      %p254 = scmp.eq.s32.totalorder %s25, 0
      %p255 = por %p253, %p254
      %p256 = scmp.ne.s32.totalorder %s248, %s250
      %p257 = scmp.eq.s32.totalorder %s30, 1
      %p258 = por %p256, %p257
      %p259 = scmp.ne.s32.totalorder %s250, %s251
      %p260 = scmp.eq.s32.totalorder %s30, 0
      %p261 = por %p259, %p260
      %p262 = scmp.ne.s32.totalorder %s250, %s251
      %p263 = scmp.eq.s32.totalorder %s31, 1
      %p264 = por %p262, %p263
      %p266 = scmp.ne.s32.totalorder %s251, %s265
      %p267 = scmp.eq.s32.totalorder %s31, 0
      %p268 = por %p266, %p267
      %s270 = sadd.s32 %s269, 1
      %p273 = scmp.eq.s32.totalorder %s25, 1
      %p274 = scmp.ne.s32.totalorder %s269, %s271
      %p275 = scmp.eq.s32.totalorder %s25, 0
      %p276 = por %p274, %p275
      %p277 = scmp.ne.s32.totalorder %s269, %s271
      %p278 = scmp.eq.s32.totalorder %s30, 1
      %p279 = por %p277, %p278
      %p280 = scmp.ne.s32.totalorder %s271, %s272
      %p281 = scmp.eq.s32.totalorder %s30, 0
      %p282 = por %p280, %p281
      %p283 = scmp.ne.s32.totalorder %s271, %s272
      %p284 = scmp.eq.s32.totalorder %s31, 1
      %p285 = por %p283, %p284
      %p287 = scmp.ne.s32.totalorder %s272, %s286
      %p288 = scmp.eq.s32.totalorder %s31, 0
      %p289 = por %p287, %p288
      %s291 = sadd.s32 %s290, 1
      %p294 = scmp.eq.s32.totalorder %s25, 1
      %p295 = scmp.ne.s32.totalorder %s290, %s292
      %p296 = scmp.eq.s32.totalorder %s25, 0
      %p297 = por %p295, %p296
      %p298 = scmp.ne.s32.totalorder %s290, %s292
      %p299 = scmp.eq.s32.totalorder %s30, 1
      %p300 = por %p298, %p299
      %p301 = scmp.ne.s32.totalorder %s292, %s293
      %p302 = scmp.eq.s32.totalorder %s30, 0
      %p303 = por %p301, %p302
      %p304 = scmp.ne.s32.totalorder %s292, %s293
      %p305 = scmp.eq.s32.totalorder %s31, 1
      %p306 = por %p304, %p305
      %p308 = scmp.ne.s32.totalorder %s293, %s307
      %p309 = scmp.eq.s32.totalorder %s31, 0
      %p310 = por %p308, %p309
      %s311 = ssub.s32 %s25, %s32
      %p312 = scmp.eq.s32.totalorder %s311, 0
      %s314 = sadd.s32 %s313, 1
      %s315 = scalar_select %p312, %s313, %s314
      %p318 = pneg %p312
      %p319 = scmp.eq.s32.totalorder %s25, 1
      %p320 = por %p318, %p319
      %p321 = scmp.ne.s32.totalorder %s313, %s316
      %p322 = scmp.eq.s32.totalorder %s25, 0
      %p323 = por %p321, %p322
      %p324 = scmp.ne.s32.totalorder %s313, %s316
      %p325 = scmp.eq.s32.totalorder %s30, 1
      %p326 = por %p324, %p325
      %p327 = scmp.ne.s32.totalorder %s316, %s317
      %p328 = scmp.eq.s32.totalorder %s30, 0
      %p329 = por %p327, %p328
      %p330 = scmp.ne.s32.totalorder %s316, %s317
      %p331 = scmp.eq.s32.totalorder %s31, 1
      %p332 = por %p330, %p331
      %p334 = scmp.ne.s32.totalorder %s317, %s333
      %p335 = scmp.eq.s32.totalorder %s31, 0
      %p336 = por %p334, %p335
      %p337 = scmp.le.s32.totalorder 1, %s25
      %p338 = scmp.lt.s32.totalorder %s25, 3
      %p339 = pnand %p337, %p338
      %p340 = pneg %p339
      // Predicated region
      $region9: #{encoder_layer_forward.1} parent=5 // pred_check
        _
      $region10: #{encoder_layer_forward.1} parent=5 // pred_check_branch
        %342 = sbr.rel (%p339) target = $region12
      $region11: #{encoder_layer_forward.1} parent=5 // pred_region
        %s343 = ssub.s32 %s25, 1
        // Predicated region
        $region13: #{encoder_layer_forward.1} parent=11 // pred_check
          %p344 = pneg %p72
        $region14: #{encoder_layer_forward.1} parent=11 // pred_check_branch
          %346 = sbr.rel (%p344) target = $region16
        $region15: #{encoder_layer_forward.1} parent=11 // pred_region
          _
        $region16: #{encoder_layer_forward.1} parent=11 // pred_fallthru
          _
        // Predicated region
        $region17: #{encoder_layer_forward.1} parent=11 // pred_check
          %p347 = pneg %p93
        $region18: #{encoder_layer_forward.1} parent=11 // pred_check_branch
          %349 = sbr.rel (%p347) target = $region20
        $region19: #{encoder_layer_forward.1} parent=11 // pred_region
          _
        $region20: #{encoder_layer_forward.1} parent=11 // pred_fallthru
          _
        // Predicated region
        $region21: #{encoder_layer_forward.1} parent=11 // pred_check
          %p350 = pneg %p114
        $region22: #{encoder_layer_forward.1} parent=11 // pred_check_branch
          %352 = sbr.rel (%p350) target = $region24
        $region23: #{encoder_layer_forward.1} parent=11 // pred_region
          _
        $region24: #{encoder_layer_forward.1} parent=11 // pred_fallthru
          _
        // Predicated region
        $region25: #{encoder_layer_forward.1} parent=11 // pred_check
          %p353 = pneg %p135
        $region26: #{encoder_layer_forward.1} parent=11 // pred_check_branch
          %355 = sbr.rel (%p353) target = $region28
        $region27: #{encoder_layer_forward.1} parent=11 // pred_region
          %357 = vsyncadd [#allocation4], 0
          %s359 = sshll.u32 %s4, 4
          %s360 = int_to_ptr.hbm [resolvable:$true] %s359
          %s361 = sshll.u32 [#allocation3], 4
          %s362 = int_to_ptr.vmem [resolvable:$true] %s361
          %364 = dma.hbm_to_vmem [thread:$0]  %s360, 16, %s362, [#allocation4]
        $region28: #{encoder_layer_forward.1} parent=11 // pred_fallthru
          _
        // Predicated region
        $region29: #{encoder_layer_forward.1} parent=11 // pred_check
          %p365 = pneg %p156
        $region30: #{encoder_layer_forward.1} parent=11 // pred_check_branch
          %367 = sbr.rel (%p365) target = $region32
        $region31: #{encoder_layer_forward.1} parent=11 // pred_region
          _
        $region32: #{encoder_layer_forward.1} parent=11 // pred_fallthru
          _
        // Predicated region
        $region33: #{encoder_layer_forward.1} parent=11 // pred_check
          %p368 = pneg %p177
        $region34: #{encoder_layer_forward.1} parent=11 // pred_check_branch
          %370 = sbr.rel (%p368) target = $region36
        $region35: #{encoder_layer_forward.1} parent=11 // pred_region
          _
        $region36: #{encoder_layer_forward.1} parent=11 // pred_fallthru
          _
        // Predicated region
        $region37: #{encoder_layer_forward.1} parent=11 // pred_check
          %p371 = pneg %p198
        $region38: #{encoder_layer_forward.1} parent=11 // pred_check_branch
          %373 = sbr.rel (%p371) target = $region40
        $region39: #{encoder_layer_forward.1} parent=11 // pred_region
          %375 = vsyncadd [#allocation7], 0
          %s376 = sshll.u32 %s7, 4
          %s377 = int_to_ptr.hbm [resolvable:$true] %s376
          %s378 = sshll.u32 [#allocation6], 4
          %s379 = int_to_ptr.vmem [resolvable:$true] %s378
          %384 = dma.hbm_to_vmem [thread:$0]  %s377, 256, %s379, [#allocation7], 64, 64, 4
        $region40: #{encoder_layer_forward.1} parent=11 // pred_fallthru
          _
        // Predicated region
        $region41: #{encoder_layer_forward.1} parent=11 // pred_check
          %p385 = pneg %p219
        $region42: #{encoder_layer_forward.1} parent=11 // pred_check_branch
          %387 = sbr.rel (%p385) target = $region44
        $region43: #{encoder_layer_forward.1} parent=11 // pred_region
          %389 = vsyncadd [#allocation7], 0
          %s391 = sshll.u32 %s8, 4
          %s392 = int_to_ptr.hbm [resolvable:$true] %s391
          %s393 = sshll.u32 [#allocation8], 4
          %s394 = int_to_ptr.vmem [resolvable:$true] %s393
          %396 = dma.hbm_to_vmem [thread:$0]  %s392, 16, %s394, [#allocation7]
        $region44: #{encoder_layer_forward.1} parent=11 // pred_fallthru
          _
        // Predicated region
        $region45: #{encoder_layer_forward.1} parent=11 // pred_check
          %p397 = pneg %p240
        $region46: #{encoder_layer_forward.1} parent=11 // pred_check_branch
          %399 = sbr.rel (%p397) target = $region48
        $region47: #{encoder_layer_forward.1} parent=11 // pred_region
          _
        $region48: #{encoder_layer_forward.1} parent=11 // pred_fallthru
          _
        // Predicated region
        $region49: #{encoder_layer_forward.1} parent=11 // pred_check
          %p400 = pneg %p261
        $region50: #{encoder_layer_forward.1} parent=11 // pred_check_branch
          %402 = sbr.rel (%p400) target = $region52
        $region51: #{encoder_layer_forward.1} parent=11 // pred_region
          %404 = vsyncadd [#allocation10], 0
          %s406 = sshll.u32 %s10, 4
          %s407 = int_to_ptr.hbm [resolvable:$true] %s406
          %s408 = sshll.u32 [#allocation9], 4
          %s409 = int_to_ptr.vmem [resolvable:$true] %s408
          %411 = dma.hbm_to_vmem [thread:$0]  %s407, 16, %s409, [#allocation10]
        $region52: #{encoder_layer_forward.1} parent=11 // pred_fallthru
          _
        // Predicated region
        $region53: #{encoder_layer_forward.1} parent=11 // pred_check
          %p412 = pneg %p282
        $region54: #{encoder_layer_forward.1} parent=11 // pred_check_branch
          %414 = sbr.rel (%p412) target = $region56
        $region55: #{encoder_layer_forward.1} parent=11 // pred_region
          _
        $region56: #{encoder_layer_forward.1} parent=11 // pred_fallthru
          _
        // Predicated region
        $region57: #{encoder_layer_forward.1} parent=11 // pred_check
          %p415 = pneg %p303
        $region58: #{encoder_layer_forward.1} parent=11 // pred_check_branch
          %417 = sbr.rel (%p415) target = $region60
        $region59: #{encoder_layer_forward.1} parent=11 // pred_region
          _
        $region60: #{encoder_layer_forward.1} parent=11 // pred_fallthru
          _
      $region12: #{encoder_layer_forward.1} parent=5 // pred_fallthru
        _
      %p418 = scmp.lt.s32.totalorder %s25, 2
      // Predicated region
      $region61: #{encoder_layer_forward.1} parent=5 // pred_check
        %p419 = pneg %p418
      $region62: #{encoder_layer_forward.1} parent=5 // pred_check_branch
        %421 = sbr.rel (%p419) target = $region64
      $region63: #{encoder_layer_forward.1} parent=5 // pred_region
        // Predicated region
        $region65: #{encoder_layer_forward.1} parent=63 // pred_check
          %p422 = pneg %p45
        $region66: #{encoder_layer_forward.1} parent=63 // pred_check_branch
          %424 = sbr.rel (%p422) target = $region68
        $region67: #{encoder_layer_forward.1} parent=63 // pred_region
          %p425 = scmp.lt.s32.totalorder %s25, 1
          %s426 = scalar_select %p425, %s25, 1
          %s427 = smul.addr %s426, 8
          %s428 = scalar_lea.vmem %s0, %s427
        $region68: #{encoder_layer_forward.1} parent=63 // pred_fallthru
          _
      $region64: #{encoder_layer_forward.1} parent=5 // pred_fallthru
        _
      %p429 = scmp.le.s32.totalorder 1, %s25
      %p430 = scmp.lt.s32.totalorder %s25, 3
      %p431 = pnand %p429, %p430
      %p432 = pneg %p431
      // Predicated region
      $region69: #{encoder_layer_forward.1} parent=5 // pred_check
        _
      $region70: #{encoder_layer_forward.1} parent=5 // pred_check_branch
        %434 = sbr.rel (%p431) target = $region72
      $region71: #{encoder_layer_forward.1} parent=5 // pred_region
        %s435 = ssub.s32 %s25, 1
        // Predicated region
        $region73: #{encoder_layer_forward.1} parent=71 // pred_check
          %p436 = pneg %p135
        $region74: #{encoder_layer_forward.1} parent=71 // pred_check_branch
          %438 = sbr.rel (%p436) target = $region76
        $region75: #{encoder_layer_forward.1} parent=71 // pred_region
          %440 = dma.done [#allocation4], 16
        $region76: #{encoder_layer_forward.1} parent=71 // pred_fallthru
          _
        // Predicated region
        $region77: #{encoder_layer_forward.1} parent=71 // pred_check
          %p441 = pneg %p198
        $region78: #{encoder_layer_forward.1} parent=71 // pred_check_branch
          %443 = sbr.rel (%p441) target = $region80
        $region79: #{encoder_layer_forward.1} parent=71 // pred_region
          %445 = dma.done [#allocation7], 256
        $region80: #{encoder_layer_forward.1} parent=71 // pred_fallthru
          _
        // Predicated region
        $region81: #{encoder_layer_forward.1} parent=71 // pred_check
          %p446 = pneg %p219
        $region82: #{encoder_layer_forward.1} parent=71 // pred_check_branch
          %448 = sbr.rel (%p446) target = $region84
        $region83: #{encoder_layer_forward.1} parent=71 // pred_region
          %450 = dma.done [#allocation7], 16
        $region84: #{encoder_layer_forward.1} parent=71 // pred_fallthru
          _
        // Predicated region
        $region85: #{encoder_layer_forward.1} parent=71 // pred_check
          %p451 = pneg %p261
        $region86: #{encoder_layer_forward.1} parent=71 // pred_check_branch
          %453 = sbr.rel (%p451) target = $region88
        $region87: #{encoder_layer_forward.1} parent=71 // pred_region
          %455 = dma.done [#allocation10], 16
        $region88: #{encoder_layer_forward.1} parent=71 // pred_fallthru
          _
        %p456 = scmp.lt.s32.totalorder %s30, 1
        %s457 = scalar_select %p456, %s30, 1
        %s458 = smul.addr %s457, 8
        %s459 = scalar_lea.vmem %s0, %s458
        %p460 = pneg %p51
        %p461 = pneg %p48
        %p462 = pneg %p72
        %p463 = pneg %p69
        %p464 = pneg %p93
        %p465 = pneg %p90
        %p466 = pneg %p114
        %p467 = pneg %p111
        %p468 = pneg %p135
        %p469 = pneg %p132
        %p470 = pneg %p156
        %p471 = pneg %p153
        %p472 = pneg %p177
        %p473 = pneg %p174
        %p474 = pneg %p198
        %p475 = pneg %p195
        %p476 = pneg %p219
        %p477 = pneg %p216
        %p478 = pneg %p240
        %p479 = pneg %p237
        %p480 = pneg %p261
        %p481 = pneg %p258
        %p482 = pneg %p282
        %p483 = pneg %p279
        %p484 = pneg %p303
        %p485 = pneg %p300
        %p486 = pneg %p329
        %p487 = pneg %p326
        %s488 = sand.u32 %s316, 1
        %s489 = scalar_lea.sflag [#allocation5], %s488
        %s490 = sand.u32 %s316, 1
        %s491 = smul.addr %s490, 8
        %s492 = scalar_lea.vmem [#allocation11], %s491
        %p493 = scmp.lt.s32.totalorder %s30, 1
        %s494 = scalar_select %p493, %s30, 1
        %s495 = smul.addr %s494, 8
        %s496 = scalar_lea.vmem %s0, %s495
        %v498 = vld [vmem:[%s496] sm:$0xff]
        %v499 = vpack.c.bf16 %v498, %v498
        %v500 = vld [vmem:[%s1] sm:$0xf]
        %v501 = vld [vmem:[%s1 + $0x4] sm:$0xf]
        %v502 = vld [vmem:[%s1 + $0x8] sm:$0xf]
        %v503 = vld [vmem:[%s1 + $0xc] sm:$0xf]
        %v504 = vld [vmem:[%s2] sm:$0x1]
        %v506 = vperm.slane %v504, 0
        %v512 = vunpack.c.l.b16 %v500
        %v513 = vunpack.c.l.b16 %v501
        %v514 = vunpack.c.l.b16 %v502
        %v515 = vunpack.c.l.b16 %v503
        %v516 = vpack.c.b16 %v513, %v512
        %v517 = vpack.c.b16 %v515, %v514
        %vm520 = vcmask 261120
        %v522 = vsel %vm520, %v499, 0
        %524 = vmatpush.bf16.msra.mxu0 0
        %525 = vmatpush.bf16.msra.mxu0 0
        %526 = vmatpush.bf16.msra.mxu0 0
        %527 = vmatpush.bf16.msra.mxu0 0
        %528 = vmatpush.bf16.msra.mxu0 0
        %529 = vmatpush.bf16.msra.mxu0 0
        %530 = vmatpush.bf16.msra.mxu0 %v517
        %531 = vmatpush.bf16.msra.mxu0 %v516
        %532 = vmatmul.bf16.gmra.mxu0 %v522
        %v533 = vpop.f32.mrf.mxu0
        %v534 = vadd.f32 %v506, %v533
        %v535 = vpop.f32.mrf.mxu0
        %536 = vdwg.mxu0
        %v537 = vpack.c.bf16 %v534, %v534
        %v539 = vunpack.c.l.b16 %v537
        %v540 = vpack.c.b16 %v539, %v539
        %541 = vrot.lane.b32.xlu0 %v540, 96
        %v542 = vpop.permute.xlu0 %541
        %vm543 = vcmask 64512
        %v545 = vsel %vm543, %v537, 0
        %v548 = vsel %vm543, %v542, 0
        %550 = vmatpush.bf16.xpose.msra.mxu0 0
        %551 = vmatpush.bf16.xpose.msra.mxu0 0
        %552 = vmatpush.bf16.xpose.msra.mxu0 0
        %553 = vmatpush.bf16.xpose.msra.mxu0 0
        %554 = vmatpush.bf16.xpose.msra.mxu0 0
        %555 = vmatpush.bf16.xpose.msra.mxu0 0
        %556 = vmatpush.bf16.xpose.msra.mxu0 0
        %557 = vmatpush.bf16.xpose.msra.mxu0 %v548
        %558 = vmatmul.bf16.gmra.mxu0 %v545
        %v559 = vpop.f32.mrf.mxu0
        %v560 = vadd.f32 0.0, %v559
        %v561 = vpop.f32.mrf.mxu0
        %562 = vdwg.mxu0
        %v563 = vsel %vm543, %v560, -inf
        %564 = vmax.xlane.f32.xlu0 %v563
        %v565 = vpop.xlane.xlu0 %564
        %v566 = vsub.f32 %v560, %v565
        %v567 = vmul.f32 %v566, 1.442695
        %v568 = vpow.pop %v567
        %v569 = vsel %vm543, %v568, 0.0
        %570 = vadd.xlane.f32.xlu0 %v569
        %v571 = vpop.xlane.xlu0 %570
        %v572 = vrcp.pop %v571
        %v573 = vmul.f32 %v568, %v572
        %v574 = vpack.c.bf16 %v573, %v573
        %575 = vrot.lane.b32.xlu0 %v540, 64
        %v576 = vpop.permute.xlu0 %575
        %v578 = vsel %vm543, %v574, 0
        %vm580 = vcmask 1043456
        %v582 = vsel %vm580, %v576, 0
        %584 = vmatpush.bf16.msra.mxu0 0
        %585 = vmatpush.bf16.msra.mxu0 0
        %586 = vmatpush.bf16.msra.mxu0 0
        %587 = vmatpush.bf16.msra.mxu0 0
        %588 = vmatpush.bf16.msra.mxu0 0
        %589 = vmatpush.bf16.msra.mxu0 0
        %590 = vmatpush.bf16.msra.mxu0 0
        %591 = vmatpush.bf16.msra.mxu0 %v582
        %592 = vmatmul.bf16.gmra.mxu0 %v578
        %v593 = vpop.f32.mrf.mxu0
        %v594 = vadd.f32 0.0, %v593
        %v595 = vpop.f32.mrf.mxu0
        %596 = vdwg.mxu0
        %597 = vst.msk [vmem:[#allocation2] sm:$0xff] %vm543, %v594
        %598 = vrot.lane.b32.xlu0 %v540, 120
        %v599 = vpop.permute.xlu0 %598
        %600 = vrot.lane.b32.xlu0 %v540, 88
        %v601 = vpop.permute.xlu0 %600
        %v603 = vsel %vm543, %v599, 0
        %v606 = vsel %vm543, %v601, 0
        %608 = vmatpush.bf16.xpose.msra.mxu0 0
        %609 = vmatpush.bf16.xpose.msra.mxu0 0
        %610 = vmatpush.bf16.xpose.msra.mxu0 0
        %611 = vmatpush.bf16.xpose.msra.mxu0 0
        %612 = vmatpush.bf16.xpose.msra.mxu0 0
        %613 = vmatpush.bf16.xpose.msra.mxu0 0
        %614 = vmatpush.bf16.xpose.msra.mxu0 0
        %615 = vmatpush.bf16.xpose.msra.mxu0 %v606
        %616 = vmatmul.bf16.gmra.mxu0 %v603
        %v617 = vpop.f32.mrf.mxu0
        %v618 = vadd.f32 0.0, %v617
        %v619 = vpop.f32.mrf.mxu0
        %620 = vdwg.mxu0
        %v621 = vsel %vm543, %v618, -inf
        %622 = vmax.xlane.f32.xlu0 %v621
        %v623 = vpop.xlane.xlu0 %622
        %v624 = vsub.f32 %v618, %v623
        %v625 = vmul.f32 %v624, 1.442695
        %v626 = vpow.pop %v625
        %v627 = vsel %vm543, %v626, 0.0
        %628 = vadd.xlane.f32.xlu0 %v627
        %v629 = vpop.xlane.xlu0 %628
        %v630 = vrcp.pop %v629
        %v631 = vmul.f32 %v626, %v630
        %v632 = vpack.c.bf16 %v631, %v631
        %633 = vrot.lane.b32.xlu0 %v540, 56
        %v634 = vpop.permute.xlu0 %633
        %v636 = vsel %vm543, %v632, 0
        %v639 = vsel %vm580, %v634, 0
        %641 = vmatpush.bf16.msra.mxu0 0
        %642 = vmatpush.bf16.msra.mxu0 0
        %643 = vmatpush.bf16.msra.mxu0 0
        %644 = vmatpush.bf16.msra.mxu0 0
        %645 = vmatpush.bf16.msra.mxu0 0
        %646 = vmatpush.bf16.msra.mxu0 0
        %647 = vmatpush.bf16.msra.mxu0 0
        %648 = vmatpush.bf16.msra.mxu0 %v639
        %649 = vmatmul.bf16.gmra.mxu0 %v636
        %v650 = vpop.f32.mrf.mxu0
        %v651 = vadd.f32 0.0, %v650
        %v652 = vpop.f32.mrf.mxu0
        %653 = vdwg.mxu0
        %655 = vrot.lane.b32.xlu0 %v651, 8
        %v656 = vpop.permute.xlu0 %655
        %vm658 = vcmask 130112
        %659 = vst.msk [vmem:[#allocation2] sm:$0xff] %vm658, %v656
        %660 = vrot.lane.b32.xlu0 %v540, 112
        %v661 = vpop.permute.xlu0 %660
        %662 = vrot.lane.b32.xlu0 %v540, 80
        %v663 = vpop.permute.xlu0 %662
        %v665 = vsel %vm543, %v661, 0
        %v668 = vsel %vm543, %v663, 0
        %670 = vmatpush.bf16.xpose.msra.mxu0 0
        %671 = vmatpush.bf16.xpose.msra.mxu0 0
        %672 = vmatpush.bf16.xpose.msra.mxu0 0
        %673 = vmatpush.bf16.xpose.msra.mxu0 0
        %674 = vmatpush.bf16.xpose.msra.mxu0 0
        %675 = vmatpush.bf16.xpose.msra.mxu0 0
        %676 = vmatpush.bf16.xpose.msra.mxu0 0
        %677 = vmatpush.bf16.xpose.msra.mxu0 %v668
        %678 = vmatmul.bf16.gmra.mxu0 %v665
        %v679 = vpop.f32.mrf.mxu0
        %v680 = vadd.f32 0.0, %v679
        %v681 = vpop.f32.mrf.mxu0
        %682 = vdwg.mxu0
        %v683 = vsel %vm543, %v680, -inf
        %684 = vmax.xlane.f32.xlu0 %v683
        %v685 = vpop.xlane.xlu0 %684
        %v686 = vsub.f32 %v680, %v685
        %v687 = vmul.f32 %v686, 1.442695
        %v688 = vpow.pop %v687
        %v689 = vsel %vm543, %v688, 0.0
        %690 = vadd.xlane.f32.xlu0 %v689
        %v691 = vpop.xlane.xlu0 %690
        %v692 = vrcp.pop %v691
        %v693 = vmul.f32 %v688, %v692
        %v694 = vpack.c.bf16 %v693, %v693
        %695 = vrot.lane.b32.xlu0 %v540, 48
        %v696 = vpop.permute.xlu0 %695
        %v698 = vsel %vm543, %v694, 0
        %v701 = vsel %vm580, %v696, 0
        %703 = vmatpush.bf16.msra.mxu0 0
        %704 = vmatpush.bf16.msra.mxu0 0
        %705 = vmatpush.bf16.msra.mxu0 0
        %706 = vmatpush.bf16.msra.mxu0 0
        %707 = vmatpush.bf16.msra.mxu0 0
        %708 = vmatpush.bf16.msra.mxu0 0
        %709 = vmatpush.bf16.msra.mxu0 0
        %710 = vmatpush.bf16.msra.mxu0 %v701
        %711 = vmatmul.bf16.gmra.mxu0 %v698
        %v712 = vpop.f32.mrf.mxu0
        %v713 = vadd.f32 0.0, %v712
        %v714 = vpop.f32.mrf.mxu0
        %715 = vdwg.mxu0
        %717 = vrot.lane.b32.xlu0 %v713, 16
        %v718 = vpop.permute.xlu0 %717
        %vm720 = vcmask 195712
        %721 = vst.msk [vmem:[#allocation2] sm:$0xff] %vm720, %v718
        %722 = vrot.lane.b32.xlu0 %v540, 104
        %v723 = vpop.permute.xlu0 %722
        %724 = vrot.lane.b32.xlu0 %v540, 72
        %v725 = vpop.permute.xlu0 %724
        %v727 = vsel %vm543, %v723, 0
        %v730 = vsel %vm543, %v725, 0
        %732 = vmatpush.bf16.xpose.msra.mxu0 0
        %733 = vmatpush.bf16.xpose.msra.mxu0 0
        %734 = vmatpush.bf16.xpose.msra.mxu0 0
        %735 = vmatpush.bf16.xpose.msra.mxu0 0
        %736 = vmatpush.bf16.xpose.msra.mxu0 0
        %737 = vmatpush.bf16.xpose.msra.mxu0 0
        %738 = vmatpush.bf16.xpose.msra.mxu0 0
        %739 = vmatpush.bf16.xpose.msra.mxu0 %v730
        %740 = vmatmul.bf16.gmra.mxu0 %v727
        %v741 = vpop.f32.mrf.mxu0
        %v742 = vadd.f32 0.0, %v741
        %v743 = vpop.f32.mrf.mxu0
        %744 = vdwg.mxu0
        %v745 = vsel %vm543, %v742, -inf
        %746 = vmax.xlane.f32.xlu0 %v745
        %v747 = vpop.xlane.xlu0 %746
        %v748 = vsub.f32 %v742, %v747
        %v749 = vmul.f32 %v748, 1.442695
        %v750 = vpow.pop %v749
        %v751 = vsel %vm543, %v750, 0.0
        %752 = vadd.xlane.f32.xlu0 %v751
        %v753 = vpop.xlane.xlu0 %752
        %v754 = vrcp.pop %v753
        %v755 = vmul.f32 %v750, %v754
        %v756 = vpack.c.bf16 %v755, %v755
        %757 = vrot.lane.b32.xlu0 %v540, 40
        %v758 = vpop.permute.xlu0 %757
        %v760 = vsel %vm543, %v756, 0
        %v763 = vsel %vm580, %v758, 0
        %765 = vmatpush.bf16.msra.mxu0 0
        %766 = vmatpush.bf16.msra.mxu0 0
        %767 = vmatpush.bf16.msra.mxu0 0
        %768 = vmatpush.bf16.msra.mxu0 0
        %769 = vmatpush.bf16.msra.mxu0 0
        %770 = vmatpush.bf16.msra.mxu0 0
        %771 = vmatpush.bf16.msra.mxu0 0
        %772 = vmatpush.bf16.msra.mxu0 %v763
        %773 = vmatmul.bf16.gmra.mxu0 %v760
        %v774 = vpop.f32.mrf.mxu0
        %v775 = vadd.f32 0.0, %v774
        %v776 = vpop.f32.mrf.mxu0
        %777 = vdwg.mxu0
        %779 = vrot.lane.b32.xlu0 %v775, 24
        %v780 = vpop.permute.xlu0 %779
        %vm782 = vcmask 261312
        %783 = vst.msk [vmem:[#allocation2] sm:$0xff] %vm782, %v780
        %v784 = vld [vmem:[#allocation2] sm:$0xff]
        %v785 = vpack.c.bf16 %v784, %v784
        %v786 = vld [vmem:[%s3] sm:$0xf]
        %v787 = vld [vmem:[%s3 + $0x4] sm:$0xf]
        %v788 = vld [vmem:[%s3 + $0x8] sm:$0xf]
        %v789 = vld [vmem:[%s3 + $0xc] sm:$0xf]
        %v790 = vld [vmem:[#allocation3] sm:$0x1]
        %v792 = vperm.slane %v790, 0
        %v798 = vunpack.c.l.b16 %v786
        %v799 = vunpack.c.l.b16 %v787
        %v800 = vunpack.c.l.b16 %v788
        %v801 = vunpack.c.l.b16 %v789
        %v802 = vpack.c.b16 %v799, %v798
        %v803 = vpack.c.b16 %v801, %v800
        %v807 = vsel %vm520, %v785, 0
        %809 = vmatpush.bf16.msra.mxu0 0
        %810 = vmatpush.bf16.msra.mxu0 0
        %811 = vmatpush.bf16.msra.mxu0 0
        %812 = vmatpush.bf16.msra.mxu0 0
        %813 = vmatpush.bf16.msra.mxu0 0
        %814 = vmatpush.bf16.msra.mxu0 0
        %815 = vmatpush.bf16.msra.mxu0 %v803
        %816 = vmatpush.bf16.msra.mxu0 %v802
        %817 = vmatmul.bf16.gmra.mxu0 %v807
        %v818 = vpop.f32.mrf.mxu0
        %v819 = vadd.f32 %v792, %v818
        %v820 = vpop.f32.mrf.mxu0
        %821 = vdwg.mxu0
        %v822 = vadd.f32 %v498, %v819
        %v823 = vld [vmem:[%s5] sm:$0x1]
        %v824 = vld [vmem:[%s6] sm:$0x1]
        %v825 = vsel %vm520, %v822, 0.0
        %826 = vadd.xlane.f32.xlu0 %v825
        %v827 = vpop.xlane.xlu0 %826
        %v828 = vrcp.pop 32.0
        %v829 = vmul.f32 32.0, %v828
        %v830 = vsub.f32 1.0, %v829
        %v831 = vmul.f32 %v828, %v830
        %v832 = vadd.f32 %v828, %v831
        %vm833 = vweird.f32 %v828
        %v834 = vsel %vm833, %v828, %v832
        %v835 = vmul.f32 %v827, %v834
        %v836 = vsub.f32 %v822, %v835
        %v837 = vmul.f32 %v836, %v836
        %v838 = vsel %vm520, %v837, 0.0
        %839 = vadd.xlane.f32.xlu0 %v838
        %v840 = vpop.xlane.xlu0 %839
        %v841 = vmul.f32 %v840, 0.032258064
        %v842 = vrsqrt.pop %v841
        %v843 = vmul.f32 %v842, %v841
        %v844 = vmul.f32 %v843, %v842
        %v845 = vmul.f32 0.5, %v844
        %v846 = vsub.f32 1.5, %v845
        %v847 = vmul.f32 %v842, %v846
        %v848 = vmul.f32 %v841, %v847
        %vm849 = vcmp.eq.f32.partialorder %v841, inf
        %v850 = vsel %vm849, %v841, %v848
        %vm851 = vcmp.eq.f32.partialorder %v841, 0.0
        %v852 = vand.u32 %v841, 2147483648
        %v853 = vsel %vm851, %v852, %v850
        %v854 = vadd.f32 %v853, 1e-06
        %v855 = vrcp.pop %v854
        %v856 = vmul.f32 %v836, %v855
        %v858 = vperm.slane %v823, 0
        %v860 = vmul.f32 %v858, %v856
        %v862 = vperm.slane %v824, 0
        %v864 = vadd.f32 %v860, %v862
        %v865 = vpack.c.bf16 %v864, %v864
        %v866 = vld [vmem:[#allocation6] sm:$0xf]
        %v867 = vld [vmem:[#allocation6 + $0x4] sm:$0xf]
        %v868 = vld [vmem:[#allocation6 + $0x8] sm:$0xf]
        %v869 = vld [vmem:[#allocation6 + $0xc] sm:$0xf]
        %v870 = vld [vmem:[#allocation8] sm:$0x1]
        %v872 = vperm.slane %v870, 0
        %v878 = vunpack.c.l.b16 %v866
        %v879 = vunpack.c.l.b16 %v867
        %v880 = vunpack.c.l.b16 %v868
        %v881 = vunpack.c.l.b16 %v869
        %v882 = vpack.c.b16 %v879, %v878
        %v883 = vpack.c.b16 %v881, %v880
        %v887 = vsel %vm520, %v865, 0
        %889 = vmatpush.bf16.msra.mxu0 0
        %890 = vmatpush.bf16.msra.mxu0 0
        %891 = vmatpush.bf16.msra.mxu0 0
        %892 = vmatpush.bf16.msra.mxu0 0
        %893 = vmatpush.bf16.msra.mxu0 0
        %894 = vmatpush.bf16.msra.mxu0 0
        %895 = vmatpush.bf16.msra.mxu0 %v883
        %896 = vmatpush.bf16.msra.mxu0 %v882
        %897 = vmatmul.bf16.gmra.mxu0 %v887
        %v898 = vpop.f32.mrf.mxu0
        %v899 = vadd.f32 %v872, %v898
        %v900 = vpop.f32.mrf.mxu0
        %901 = vdwg.mxu0
        %v902 = vmax.f32 %v899, 0.0
        %v903 = vpack.c.bf16 %v902, %v902
        %v904 = vld [vmem:[%s9] sm:$0xf]
        %v905 = vld [vmem:[%s9 + $0x4] sm:$0xf]
        %v906 = vld [vmem:[%s9 + $0x8] sm:$0xf]
        %v907 = vld [vmem:[%s9 + $0xc] sm:$0xf]
        %v908 = vld [vmem:[%s9 + $0x10] sm:$0xf]
        %v909 = vld [vmem:[%s9 + $0x14] sm:$0xf]
        %v910 = vld [vmem:[%s9 + $0x18] sm:$0xf]
        %v911 = vld [vmem:[%s9 + $0x1c] sm:$0xf]
        %v912 = vld [vmem:[#allocation9] sm:$0x1]
        %v914 = vperm.slane %v912, 0
        %v924 = vunpack.c.l.b16 %v904
        %v925 = vunpack.c.l.b16 %v905
        %v926 = vunpack.c.l.b16 %v906
        %v927 = vunpack.c.l.b16 %v907
        %v928 = vunpack.c.l.b16 %v908
        %v929 = vunpack.c.l.b16 %v909
        %v930 = vunpack.c.l.b16 %v910
        %v931 = vunpack.c.l.b16 %v911
        %v932 = vpack.c.b16 %v925, %v924
        %v933 = vpack.c.b16 %v927, %v926
        %v934 = vpack.c.b16 %v929, %v928
        %v935 = vpack.c.b16 %v931, %v930
        %vm940 = vcmask 523264
        %v942 = vsel %vm940, %v903, 0
        %944 = vmatpush.bf16.msra.mxu0 0
        %945 = vmatpush.bf16.msra.mxu0 0
        %946 = vmatpush.bf16.msra.mxu0 0
        %947 = vmatpush.bf16.msra.mxu0 0
        %948 = vmatpush.bf16.msra.mxu0 %v935
        %949 = vmatpush.bf16.msra.mxu0 %v934
        %950 = vmatpush.bf16.msra.mxu0 %v933
        %951 = vmatpush.bf16.msra.mxu0 %v932
        %952 = vmatmul.bf16.gmra.mxu0 %v942
        %v953 = vpop.f32.mrf.mxu0
        %v954 = vadd.f32 %v914, %v953
        %v955 = vpop.f32.mrf.mxu0
        %956 = vdwg.mxu0
        %v957 = vadd.f32 %v864, %v954
        %v958 = vld [vmem:[%s11] sm:$0x1]
        %v959 = vld [vmem:[%s12] sm:$0x1]
        %v960 = vsel %vm520, %v957, 0.0
        %961 = vadd.xlane.f32.xlu0 %v960
        %v962 = vpop.xlane.xlu0 %961
        %v963 = vmul.f32 %v962, %v834
        %v964 = vsub.f32 %v957, %v963
        %v965 = vmul.f32 %v964, %v964
        %v966 = vsel %vm520, %v965, 0.0
        %967 = vadd.xlane.f32.xlu0 %v966
        %v968 = vpop.xlane.xlu0 %967
        %v969 = vmul.f32 %v968, 0.032258064
        %v970 = vrsqrt.pop %v969
        %v971 = vmul.f32 %v970, %v969
        %v972 = vmul.f32 %v971, %v970
        %v973 = vmul.f32 0.5, %v972
        %v974 = vsub.f32 1.5, %v973
        %v975 = vmul.f32 %v970, %v974
        %v976 = vmul.f32 %v969, %v975
        %vm977 = vcmp.eq.f32.partialorder %v969, inf
        %v978 = vsel %vm977, %v969, %v976
        %vm979 = vcmp.eq.f32.partialorder %v969, 0.0
        %v980 = vand.u32 %v969, 2147483648
        %v981 = vsel %vm979, %v980, %v978
        %v982 = vadd.f32 %v981, 1e-06
        %v983 = vrcp.pop %v982
        %v984 = vmul.f32 %v964, %v983
        %v986 = vperm.slane %v958, 0
        %v988 = vmul.f32 %v986, %v984
        %v990 = vperm.slane %v959, 0
        %v992 = vadd.f32 %v988, %v990
        %993 = vst.msk [vmem:[%s492] sm:$0xff] %vm520, %v992
        %s994 = sand.u32 %s316, 1
        %s995 = scalar_lea.sflag [#allocation5], %s994
        %s996 = sand.u32 %s316, 1
        %s997 = smul.addr %s996, 8
        %s998 = scalar_lea.vmem [#allocation11], %s997
        // Predicated region
        $region89: #{encoder_layer_forward.1} parent=71 // pred_check
          %p999 = pneg %p326
        $region90: #{encoder_layer_forward.1} parent=71 // pred_check_branch
          %1001 = sbr.rel (%p999) target = $region92
        $region91: #{encoder_layer_forward.1} parent=71 // pred_region
          %1003 = vsyncadd %s995, 0
          %s1004 = smul.addr %s30, 8
          %s1005 = scalar_lea.hbm %s13, %s1004
          %s1007 = sshll.u32 %s998, 4
          %s1008 = int_to_ptr.vmem [resolvable:$true] %s1007
          %s1009 = sshll.u32 %s1005, 4
          %s1010 = int_to_ptr.hbm [resolvable:$true] %s1009
          %1012 = dma.vmem_to_hbm [thread:$0]  %s1008, 128, %s1010, %s995
        $region92: #{encoder_layer_forward.1} parent=71 // pred_fallthru
          _
      $region72: #{encoder_layer_forward.1} parent=5 // pred_fallthru
        _
      %p1013 = scmp.le.s32.totalorder 2, %s25
      // Predicated region
      $region93: #{encoder_layer_forward.1} parent=5 // pred_check
        %p1014 = pneg %p1013
      $region94: #{encoder_layer_forward.1} parent=5 // pred_check_branch
        %1016 = sbr.rel (%p1014) target = $region96
      $region95: #{encoder_layer_forward.1} parent=5 // pred_region
        %s1017 = ssub.s32 %s25, 2
        // Predicated region
        $region97: #{encoder_layer_forward.1} parent=95 // pred_check
          %p1018 = pneg %p332
        $region98: #{encoder_layer_forward.1} parent=95 // pred_check_branch
          %1020 = sbr.rel (%p1018) target = $region100
        $region99: #{encoder_layer_forward.1} parent=95 // pred_region
          %s1021 = sand.u32 %s317, 1
          %s1022 = scalar_lea.sflag [#allocation5], %s1021
          %s1023 = sand.u32 %s317, 1
          %s1024 = smul.addr %s1023, 8
          %s1025 = scalar_lea.vmem [#allocation11], %s1024
          %1027 = dma.done %s1022, 128
        $region100: #{encoder_layer_forward.1} parent=95 // pred_fallthru
          _
      $region96: #{encoder_layer_forward.1} parent=5 // pred_fallthru
        _
    $region6: #{encoder_layer_forward.1} parent=1 // loop_footer
      %s29 = sadd.s32 1, %s25
    $region7: #{encoder_layer_forward.1} parent=1 // loop_footer_branch
      %24 = sbr.rel target = $region3
    $region8: #{encoder_layer_forward.1} parent=1 // loop_exit
      _
    %1028 = vsyncpa [#allocation4], 1
    %s1029 = scalar_lea.sflag [#allocation4], 1
    %1030 = vsyncpa %s1029, 1
    %1031 = vsyncpa [#allocation7], 1
    %1032 = vsyncpa [#allocation10], 1
    %1033 = vsyncpa [#allocation5], 1
    %s1034 = scalar_lea.sflag [#allocation5], 1
    %1035 = vsyncpa %s1034, 1

</llo_original>
